<compile_context>
chip_gen: v6e
topology: v6e:2x2x1
jax: 0.10.0
libtpu: 0.0.40
codegen_flags: <defaults>
</compile_context>

<pallas_src>
import math

import jax
import jax.numpy as jnp
from jax import lax
from jax.experimental import pallas as pl
from jax.experimental.pallas import tpu as pltpu

_TWO_PI_E = 2.0 * math.pi * math.e
_LANE = 128


def _round_up(x, m):
    return ((x + m - 1) // m) * m


def _tpu_vmem_capacity():
    try:
        return int(pltpu.get_tpu_info().vmem_capacity_bytes)
    except Exception:
        return 64 * 1024 * 1024          # conservative (v7x per-TensorCore)


def _tensorcores_per_chip():
    """Best-effort TensorCore count; default 1 (always correct, just serial)."""
    try:
        info = pltpu.get_tpu_info()
        for name in ("num_cores", "core_count", "num_tensorcores",
                     "tensorcore_count", "cores_per_chip"):
            v = getattr(info, name, None)
            if v:
                return int(v)
    except Exception:
        pass
    try:
        kind = jax.devices()[0].device_kind.lower()
        if "v7" in kind or "v4" in kind:   # 2 TensorCores per chip
            return 2
    except Exception:
        pass
    return 1


def _make_kernel(B, C, S_tile, subp, s_valid, need_mask):
    n_chunks = S_tile // subp

    def _fold8(v):                       # (subp, 128) f32 -> (8, 128) f32
        out = v[0:8, :]
        for k in range(1, subp // 8):
            out = out + v[k * 8:(k + 1) * 8, :]
        return out

    def kernel(x_ref, o_ref, ssq_ref, s2c_ref, s2b_ref):
        p = pl.program_id(0)
        i = pl.program_id(1)

        @pl.when(i == 0)
        def _():
            ssq_ref[...] = jnp.zeros_like(ssq_ref)
            s2c_ref[...] = jnp.zeros_like(s2c_ref)
            s2b_ref[...] = jnp.zeros_like(s2b_ref)

        row0 = (p * pl.num_programs(1) + i) * S_tile
        if need_mask:
            row_iota = lax.broadcasted_iota(jnp.int32, (subp, _LANE), 0)

        @pl.loop(0, n_chunks)
        def _(s):
            r = pl.multiple_of(s * subp, subp)

            # Single pass over (b, c): c-outer / b-inner, per-(b,c) slab loaded
            # once in its native dtype, upcast fused with the square, running
            # partials kept in vregs.
            ssq_p = jnp.zeros((subp, _LANE), jnp.float32)
            s2b_p = jnp.zeros((subp, _LANE), jnp.float32)
            sum_c = [jnp.zeros((subp, _LANE), jnp.float32) for _ in range(B)]
            for c in range(C):
                sum_b = jnp.zeros((subp, _LANE), jnp.float32)
                for b in range(B):
                    x = x_ref[b, c, pl.ds(r, subp), :].astype(jnp.float32)
                    ssq_p = ssq_p + x * x
                    sum_b = sum_b + x
                    sum_c[b] = sum_c[b] + x
                s2b_p = s2b_p + sum_b * sum_b
            s2c_p = jnp.zeros((subp, _LANE), jnp.float32)
            for b in range(B):
                s2c_p = s2c_p + sum_c[b] * sum_c[b]

            if need_mask:
                # Row-granular mask of the out-of-bounds tail of the last
                # partial block (VMEM there is garbage, not zero).  Intra-row
                # padding (to 128-lane granularity) is real zeros in HBM.
                rows = row0 + r + row_iota
                valid = rows < s_valid
                ssq_p = jnp.where(valid, ssq_p, 0.0)
                s2c_p = jnp.where(valid, s2c_p, 0.0)
                s2b_p = jnp.where(valid, s2b_p, 0.0)

            ssq_ref[...] += _fold8(ssq_p)
            s2c_ref[...] += _fold8(s2c_p)
            s2b_ref[...] += _fold8(s2b_p)

        @pl.when(i == pl.num_programs(1) - 1)
        def _():
            o_ref[0, 0, :, :] = ssq_ref[...]
            o_ref[0, 1, :, :] = s2c_ref[...]
            o_ref[0, 2, :, :] = s2b_ref[...]

    return kernel


def loss_concentration(softmask, *, target_block_bytes=3 << 20):
    B, C, H, W = softmask.shape
    hw = H * W
    dtype = softmask.dtype
    itemsize = jnp.dtype(dtype).itemsize

    # dtype-aware sublane packing: f32 -> 8 rows/vreg, bf16 -> 16, int8/fp8 -> 32
    subp = max(8, 32 // itemsize)
    grain = subp * _LANE

    # ---- minimal alignment pad (exact: zero lanes contribute 0 to all sums) --
    x = softmask.reshape(B, C, hw)
    hw_al = _round_up(hw, grain)
    if hw_al != hw:
        # TODO(synk): a lane-masked 3-D layout would avoid this copy for
        # H*W % grain != 0 shapes, at the cost of sublane waste when C < 8.
        x = jnp.pad(x, ((0, 0), (0, 0), (0, hw_al - hw)))
    s_valid = hw_al // _LANE                  # rows of 128 lanes (multiple of subp)
    x = x.reshape(B, C, s_valid, _LANE)

    # ---- block size: target ~3 MiB of input per grid step --------------------
    rows_target = max(subp, target_block_bytes // (B * C * _LANE * itemsize))
    S_tile = max(subp, (rows_target // subp) * subp)
    S_tile = min(S_tile, s_valid)
    # TODO(synk): very large B*C (block > VMEM even at S_tile=subp) would need
    # an extra split over B/C; typical loss shapes never hit this.

    n_blocks = pl.cdiv(s_valid, S_tile)

    # ---- megacore split: only on multi-TC chips, only when it divides evenly -
    ntc = _tensorcores_per_chip()
    P = ntc if (ntc > 1 and n_blocks % ntc == 0) else 1
    inner = n_blocks // P
    need_mask = (n_blocks * S_tile != s_valid)   # partial last block -> mask

    block_bytes = B * C * S_tile * _LANE * itemsize
    vmem_cap = _tpu_vmem_capacity()
    vmem_need = (2 * block_bytes                 # double-buffered input block
                 + 3 * 8 * _LANE * 4             # (8,128) accumulators
                 + 2 * 3 * 8 * _LANE * 4         # output block
                 + (4 << 20))                    # in-kernel working set / slack
    vmem_limit = int(min(vmem_cap, max(vmem_need, 32 * 1024 * 1024)))

    cost = pl.CostEstimate(
        flops=6 * B * C * hw_al,
        transcendentals=0,
        bytes_accessed=B * C * hw_al * itemsize + P * 3 * 8 * _LANE * 4,
    )

    kernel = _make_kernel(B, C, S_tile, subp, s_valid, need_mask)

    # TODO(synk): on v7x, confirm in xprof that the leading "parallel" axis is
    # sharded across both TensorCores; switch to pltpu.CORE_PARALLEL if not.
    out = pl.pallas_call(
        kernel,
        out_shape=jax.ShapeDtypeStruct((P, 3, 8, _LANE), jnp.float32),
        grid_spec=pltpu.PrefetchScalarGridSpec(
            num_scalar_prefetch=0,
            grid=(P, inner),
            in_specs=[pl.BlockSpec((B, C, S_tile, _LANE),
                                   lambda p, i: (0, 0, p * inner + i, 0))],
            out_specs=pl.BlockSpec((1, 3, 8, _LANE), lambda p, i: (p, 0, 0, 0)),
            scratch_shapes=[pltpu.VMEM((8, _LANE), jnp.float32)] * 3,
        ),
        compiler_params=pltpu.CompilerParams(
            dimension_semantics=("parallel", "arbitrary"),
            vmem_limit_bytes=vmem_limit,
        ),
        cost_estimate=cost,
    )(x)

    # ---- finalize in JAX (tiny: P*3*8*128 floats) -----------------------------
    sums = jnp.sum(out, axis=(0, 2, 3), dtype=jnp.float32)   # (3,)
    ssq, s2c, s2b = sums[0], sums[1], sums[2]

    # NOTE: unbiased variance needs B > 1 and C > 1 (matches torch NaN/inf
    # behaviour otherwise).  One-pass formula in f32; clamp at 0 before sqrt
    # so rounding on near-zero variances can't produce NaN.
    sum_var_c = (ssq - s2c / C) / (C - 1)    # Σ over (b,h,w) of var along C
    sum_var_b = (ssq - s2b / B) / (B - 1)    # Σ over (c,h,w) of var along B
    var_x = sum_var_c / (B * hw)
    var_y = sum_var_b / (C * hw)
    total = jnp.maximum(var_x + var_y, 0.0)
    return (_TWO_PI_E * jnp.sqrt(total)).astype(jnp.float32)


def _reference(softmask):
    var_x = jnp.mean(jnp.var(softmask, axis=1, ddof=1))
    var_y = jnp.mean(jnp.var(softmask, axis=0, ddof=1))
    return (_TWO_PI_E * jnp.sqrt(var_x + var_y)).astype(jnp.float32)


if __name__ == "__main__":
    key = jax.random.PRNGKey(0)
    # Small NCHW input consistent with the module's forward: (B, C, H, W)
    x = jax.random.uniform(key, (2, 4, 16, 16), dtype=jnp.float32)

    loss = loss_concentration(x)
    loss = jax.block_until_ready(loss)

    ref = _reference(x)
    assert jnp.allclose(loss, ref, rtol=1e-5, atol=1e-5), (loss, ref)

    print("KERNEL_OK")
</pallas_src>

<mosaic_0001>
module attributes {stable_mosaic.version = 11 : i64} {
  func.func @kernel(%arg0: i32, %arg1: i32, %arg2: memref<2x4x8x128xf32, #tpu.memory_space<vmem>>, %arg3: memref<1x3x8x128xf32, #tpu.memory_space<vmem>>, %arg4: memref<8x128xf32, #tpu.memory_space<vmem>>, %arg5: memref<8x128xf32, #tpu.memory_space<vmem>>, %arg6: memref<8x128xf32, #tpu.memory_space<vmem>>) attributes {dimension_semantics = [#tpu.dimension_semantics<parallel>, #tpu.dimension_semantics<arbitrary>], iteration_bounds = array<i64: 1, 1>, scalar_prefetch = 0 : i64, scratch_operands = 3 : i64, tpu.core_type = #tpu.core_type<tc>, window_params = [{transform_indices = @transform_0, window_bounds = array<i64: 2, 4, 8, 128>}, {transform_indices = @transform_1, window_bounds = array<i64: 1, 3, 8, 128>}]} {
    %c0_i32 = arith.constant 0 : i32
    %0 = arith.cmpi eq, %arg1, %c0_i32 : i32
    %1 = arith.extui %0 : i1 to i32
    %c0_i32_0 = arith.constant 0 : i32
    %2 = arith.cmpi ne, %1, %c0_i32_0 : i32
    scf.if %2 {
      %cst_46 = arith.constant 0.000000e+00 : f32
      %96 = vector.broadcast %cst_46 : f32 to vector<8x128xf32>
      %c0_47 = arith.constant 0 : index
      %c0_48 = arith.constant 0 : index
      %97 = vector.load %arg4[%c0_47, %c0_48] : memref<8x128xf32, #tpu.memory_space<vmem>>, vector<8x128xf32>
      tpu.vector_store %arg4[%c0_47, %c0_48], %96 {strides = array<i32>} : memref<8x128xf32, #tpu.memory_space<vmem>>, vector<8x128xf32>,
      %cst_49 = arith.constant 0.000000e+00 : f32
      %98 = vector.broadcast %cst_49 : f32 to vector<8x128xf32>
      %c0_50 = arith.constant 0 : index
      %c0_51 = arith.constant 0 : index
      %99 = vector.load %arg5[%c0_50, %c0_51] : memref<8x128xf32, #tpu.memory_space<vmem>>, vector<8x128xf32>
      tpu.vector_store %arg5[%c0_50, %c0_51], %98 {strides = array<i32>} : memref<8x128xf32, #tpu.memory_space<vmem>>, vector<8x128xf32>,
      %cst_52 = arith.constant 0.000000e+00 : f32
      %100 = vector.broadcast %cst_52 : f32 to vector<8x128xf32>
      %c0_53 = arith.constant 0 : index
      %c0_54 = arith.constant 0 : index
      %101 = vector.load %arg6[%c0_53, %c0_54] : memref<8x128xf32, #tpu.memory_space<vmem>>, vector<8x128xf32>
      tpu.vector_store %arg6[%c0_53, %c0_54], %100 {strides = array<i32>} : memref<8x128xf32, #tpu.memory_space<vmem>>, vector<8x128xf32>,
    } else {
    }
    %c0_i32_1 = arith.constant 0 : i32
    %c1_i32 = arith.constant 1 : i32
    %3 = arith.muli %c0_i32_1, %c1_i32 : i32
    %c0_i32_2 = arith.constant 0 : i32
    %4 = arith.addi %c0_i32_2, %3 : i32
    %c8_i32 = arith.constant 8 : i32
    %5 = arith.muli %4, %c8_i32 : i32
    %6 = tpu.assume_multiple %5, 8 : i32
    %cst = arith.constant 0.000000e+00 : f32
    %7 = vector.broadcast %cst : f32 to vector<8x128xf32>
    %cst_3 = arith.constant 0.000000e+00 : f32
    %8 = vector.broadcast %cst_3 : f32 to vector<8x128xf32>
    %cst_4 = arith.constant 0.000000e+00 : f32
    %9 = vector.broadcast %cst_4 : f32 to vector<8x128xf32>
    %cst_5 = arith.constant 0.000000e+00 : f32
    %10 = vector.broadcast %cst_5 : f32 to vector<8x128xf32>
    %cst_6 = arith.constant 0.000000e+00 : f32
    %11 = vector.broadcast %cst_6 : f32 to vector<8x128xf32>
    %c0 = arith.constant 0 : index
    %c0_7 = arith.constant 0 : index
    %12 = arith.index_cast %6 : i32 to index
    %c0_8 = arith.constant 0 : index
    %13 = vector.load %arg2[%c0, %c0_7, %12, %c0_8] : memref<2x4x8x128xf32, #tpu.memory_space<vmem>>, vector<1x1x8x128xf32>
    %14 = vector.shape_cast %13 : vector<1x1x8x128xf32> to vector<8x128xf32>
    %15 = arith.mulf %14, %14 : vector<8x128xf32>
    %16 = arith.addf %7, %15 : vector<8x128xf32>
    %17 = arith.addf %11, %14 : vector<8x128xf32>
    %18 = arith.addf %9, %14 : vector<8x128xf32>
    %c1 = arith.constant 1 : index
    %c0_9 = arith.constant 0 : index
    %19 = arith.index_cast %6 : i32 to index
    %c0_10 = arith.constant 0 : index
    %20 = vector.load %arg2[%c1, %c0_9, %19, %c0_10] : memref<2x4x8x128xf32, #tpu.memory_space<vmem>>, vector<1x1x8x128xf32>
    %21 = vector.shape_cast %20 : vector<1x1x8x128xf32> to vector<8x128xf32>
    %22 = arith.mulf %21, %21 : vector<8x128xf32>
    %23 = arith.addf %16, %22 : vector<8x128xf32>
    %24 = arith.addf %17, %21 : vector<8x128xf32>
    %25 = arith.addf %10, %21 : vector<8x128xf32>
    %26 = arith.mulf %24, %24 : vector<8x128xf32>
    %27 = arith.addf %8, %26 : vector<8x128xf32>
    %cst_11 = arith.constant 0.000000e+00 : f32
    %28 = vector.broadcast %cst_11 : f32 to vector<8x128xf32>
    %c0_12 = arith.constant 0 : index
    %c1_13 = arith.constant 1 : index
    %29 = arith.index_cast %6 : i32 to index
    %c0_14 = arith.constant 0 : index
    %30 = vector.load %arg2[%c0_12, %c1_13, %29, %c0_14] : memref<2x4x8x128xf32, #tpu.memory_space<vmem>>, vector<1x1x8x128xf32>
    %31 = vector.shape_cast %30 : vector<1x1x8x128xf32> to vector<8x128xf32>
    %32 = arith.mulf %31, %31 : vector<8x128xf32>
    %33 = arith.addf %23, %32 : vector<8x128xf32>
    %34 = arith.addf %28, %31 : vector<8x128xf32>
    %35 = arith.addf %18, %31 : vector<8x128xf32>
    %c1_15 = arith.constant 1 : index
    %c1_16 = arith.constant 1 : index
    %36 = arith.index_cast %6 : i32 to index
    %c0_17 = arith.constant 0 : index
    %37 = vector.load %arg2[%c1_15, %c1_16, %36, %c0_17] : memref<2x4x8x128xf32, #tpu.memory_space<vmem>>, vector<1x1x8x128xf32>
    %38 = vector.shape_cast %37 : vector<1x1x8x128xf32> to vector<8x128xf32>
    %39 = arith.mulf %38, %38 : vector<8x128xf32>
    %40 = arith.addf %33, %39 : vector<8x128xf32>
    %41 = arith.addf %34, %38 : vector<8x128xf32>
    %42 = arith.addf %25, %38 : vector<8x128xf32>
    %43 = arith.mulf %41, %41 : vector<8x128xf32>
    %44 = arith.addf %27, %43 : vector<8x128xf32>
    %cst_18 = arith.constant 0.000000e+00 : f32
    %45 = vector.broadcast %cst_18 : f32 to vector<8x128xf32>
    %c0_19 = arith.constant 0 : index
    %c2 = arith.constant 2 : index
    %46 = arith.index_cast %6 : i32 to index
    %c0_20 = arith.constant 0 : index
    %47 = vector.load %arg2[%c0_19, %c2, %46, %c0_20] : memref<2x4x8x128xf32, #tpu.memory_space<vmem>>, vector<1x1x8x128xf32>
    %48 = vector.shape_cast %47 : vector<1x1x8x128xf32> to vector<8x128xf32>
    %49 = arith.mulf %48, %48 : vector<8x128xf32>
    %50 = arith.addf %40, %49 : vector<8x128xf32>
    %51 = arith.addf %45, %48 : vector<8x128xf32>
    %52 = arith.addf %35, %48 : vector<8x128xf32>
    %c1_21 = arith.constant 1 : index
    %c2_22 = arith.constant 2 : index
    %53 = arith.index_cast %6 : i32 to index
    %c0_23 = arith.constant 0 : index
    %54 = vector.load %arg2[%c1_21, %c2_22, %53, %c0_23] : memref<2x4x8x128xf32, #tpu.memory_space<vmem>>, vector<1x1x8x128xf32>
    %55 = vector.shape_cast %54 : vector<1x1x8x128xf32> to vector<8x128xf32>
    %56 = arith.mulf %55, %55 : vector<8x128xf32>
    %57 = arith.addf %50, %56 : vector<8x128xf32>
    %58 = arith.addf %51, %55 : vector<8x128xf32>
    %59 = arith.addf %42, %55 : vector<8x128xf32>
    %60 = arith.mulf %58, %58 : vector<8x128xf32>
    %61 = arith.addf %44, %60 : vector<8x128xf32>
    %cst_24 = arith.constant 0.000000e+00 : f32
    %62 = vector.broadcast %cst_24 : f32 to vector<8x128xf32>
    %c0_25 = arith.constant 0 : index
    %c3 = arith.constant 3 : index
    %63 = arith.index_cast %6 : i32 to index
    %c0_26 = arith.constant 0 : index
    %64 = vector.load %arg2[%c0_25, %c3, %63, %c0_26] : memref<2x4x8x128xf32, #tpu.memory_space<vmem>>, vector<1x1x8x128xf32>
    %65 = vector.shape_cast %64 : vector<1x1x8x128xf32> to vector<8x128xf32>
    %66 = arith.mulf %65, %65 : vector<8x128xf32>
    %67 = arith.addf %57, %66 : vector<8x128xf32>
    %68 = arith.addf %62, %65 : vector<8x128xf32>
    %69 = arith.addf %52, %65 : vector<8x128xf32>
    %c1_27 = arith.constant 1 : index
    %c3_28 = arith.constant 3 : index
    %70 = arith.index_cast %6 : i32 to index
    %c0_29 = arith.constant 0 : index
    %71 = vector.load %arg2[%c1_27, %c3_28, %70, %c0_29] : memref<2x4x8x128xf32, #tpu.memory_space<vmem>>, vector<1x1x8x128xf32>
    %72 = vector.shape_cast %71 : vector<1x1x8x128xf32> to vector<8x128xf32>
    %73 = arith.mulf %72, %72 : vector<8x128xf32>
    %74 = arith.addf %67, %73 : vector<8x128xf32>
    %75 = arith.addf %68, %72 : vector<8x128xf32>
    %76 = arith.addf %59, %72 : vector<8x128xf32>
    %77 = arith.mulf %75, %75 : vector<8x128xf32>
    %78 = arith.addf %61, %77 : vector<8x128xf32>
    %cst_30 = arith.constant 0.000000e+00 : f32
    %79 = vector.broadcast %cst_30 : f32 to vector<8x128xf32>
    %80 = arith.mulf %69, %69 : vector<8x128xf32>
    %81 = arith.addf %79, %80 : vector<8x128xf32>
    %82 = arith.mulf %76, %76 : vector<8x128xf32>
    %83 = arith.addf %81, %82 : vector<8x128xf32>
    %c0_31 = arith.constant 0 : index
    %c0_32 = arith.constant 0 : index
    %84 = vector.load %arg4[%c0_31, %c0_32] : memref<8x128xf32, #tpu.memory_space<vmem>>, vector<8x128xf32>
    %85 = arith.addf %84, %74 : vector<8x128xf32>
    %c0_33 = arith.constant 0 : index
    %c0_34 = arith.constant 0 : index
    %86 = vector.load %arg4[%c0_33, %c0_34] : memref<8x128xf32, #tpu.memory_space<vmem>>, vector<8x128xf32>
    tpu.vector_store %arg4[%c0_33, %c0_34], %85 {strides = array<i32>} : memref<8x128xf32, #tpu.memory_space<vmem>>, vector<8x128xf32>,
    %c0_35 = arith.constant 0 : index
    %c0_36 = arith.constant 0 : index
    %87 = vector.load %arg5[%c0_35, %c0_36] : memref<8x128xf32, #tpu.memory_space<vmem>>, vector<8x128xf32>
    %88 = arith.addf %87, %83 : vector<8x128xf32>
    %c0_37 = arith.constant 0 : index
    %c0_38 = arith.constant 0 : index
    %89 = vector.load %arg5[%c0_37, %c0_38] : memref<8x128xf32, #tpu.memory_space<vmem>>, vector<8x128xf32>
    tpu.vector_store %arg5[%c0_37, %c0_38], %88 {strides = array<i32>} : memref<8x128xf32, #tpu.memory_space<vmem>>, vector<8x128xf32>,
    %c0_39 = arith.constant 0 : index
    %c0_40 = arith.constant 0 : index
    %90 = vector.load %arg6[%c0_39, %c0_40] : memref<8x128xf32, #tpu.memory_space<vmem>>, vector<8x128xf32>
    %91 = arith.addf %90, %78 : vector<8x128xf32>
    %c0_41 = arith.constant 0 : index
    %c0_42 = arith.constant 0 : index
    %92 = vector.load %arg6[%c0_41, %c0_42] : memref<8x128xf32, #tpu.memory_space<vmem>>, vector<8x128xf32>
    tpu.vector_store %arg6[%c0_41, %c0_42], %91 {strides = array<i32>} : memref<8x128xf32, #tpu.memory_space<vmem>>, vector<8x128xf32>,
    %c1_i32_43 = arith.constant 1 : i32
    %c0_i32_44 = arith.constant 0 : i32
    %93 = arith.cmpi eq, %arg1, %c0_i32_44 : i32
    %94 = arith.extui %93 : i1 to i32
    %c0_i32_45 = arith.constant 0 : i32
    %95 = arith.cmpi ne, %94, %c0_i32_45 : i32
    scf.if %95 {
      %c0_46 = arith.constant 0 : index
      %c0_47 = arith.constant 0 : index
      %96 = vector.load %arg4[%c0_46, %c0_47] : memref<8x128xf32, #tpu.memory_space<vmem>>, vector<8x128xf32>
      %c0_48 = arith.constant 0 : index
      %c0_49 = arith.constant 0 : index
      %c0_50 = arith.constant 0 : index
      %c0_51 = arith.constant 0 : index
      %97 = vector.load %arg3[%c0_48, %c0_49, %c0_50, %c0_51] : memref<1x3x8x128xf32, #tpu.memory_space<vmem>>, vector<1x1x8x128xf32>
      %98 = vector.shape_cast %97 : vector<1x1x8x128xf32> to vector<8x128xf32>
      %99 = vector.shape_cast %96 : vector<8x128xf32> to vector<1x1x8x128xf32>
      tpu.vector_store %arg3[%c0_48, %c0_49, %c0_50, %c0_51], %99 {strides = array<i32>} : memref<1x3x8x128xf32, #tpu.memory_space<vmem>>, vector<1x1x8x128xf32>,
      %c0_52 = arith.constant 0 : index
      %c0_53 = arith.constant 0 : index
      %100 = vector.load %arg5[%c0_52, %c0_53] : memref<8x128xf32, #tpu.memory_space<vmem>>, vector<8x128xf32>
      %c0_54 = arith.constant 0 : index
      %c1_55 = arith.constant 1 : index
      %c0_56 = arith.constant 0 : index
      %c0_57 = arith.constant 0 : index
      %101 = vector.load %arg3[%c0_54, %c1_55, %c0_56, %c0_57] : memref<1x3x8x128xf32, #tpu.memory_space<vmem>>, vector<1x1x8x128xf32>
      %102 = vector.shape_cast %101 : vector<1x1x8x128xf32> to vector<8x128xf32>
      %103 = vector.shape_cast %100 : vector<8x128xf32> to vector<1x1x8x128xf32>
      tpu.vector_store %arg3[%c0_54, %c1_55, %c0_56, %c0_57], %103 {strides = array<i32>} : memref<1x3x8x128xf32, #tpu.memory_space<vmem>>, vector<1x1x8x128xf32>,
      %c0_58 = arith.constant 0 : index
      %c0_59 = arith.constant 0 : index
      %104 = vector.load %arg6[%c0_58, %c0_59] : memref<8x128xf32, #tpu.memory_space<vmem>>, vector<8x128xf32>
      %c0_60 = arith.constant 0 : index
      %c2_61 = arith.constant 2 : index
      %c0_62 = arith.constant 0 : index
      %c0_63 = arith.constant 0 : index
      %105 = vector.load %arg3[%c0_60, %c2_61, %c0_62, %c0_63] : memref<1x3x8x128xf32, #tpu.memory_space<vmem>>, vector<1x1x8x128xf32>
      %106 = vector.shape_cast %105 : vector<1x1x8x128xf32> to vector<8x128xf32>
      %107 = vector.shape_cast %104 : vector<8x128xf32> to vector<1x1x8x128xf32>
      tpu.vector_store %arg3[%c0_60, %c2_61, %c0_62, %c0_63], %107 {strides = array<i32>} : memref<1x3x8x128xf32, #tpu.memory_space<vmem>>, vector<1x1x8x128xf32>,
    } else {
    }
    return
  }
  func.func @transform_0(%arg0: i32, %arg1: i32) -> (i32, i32, i32, i32) {
    %c1_i32 = arith.constant 1 : i32
    %0 = arith.muli %arg0, %c1_i32 : i32
    %1 = arith.addi %0, %arg1 : i32
    %c0_i32 = arith.constant 0 : i32
    %c0_i32_0 = arith.constant 0 : i32
    %c0_i32_1 = arith.constant 0 : i32
    %c0_i32_2 = arith.constant 0 : i32
    return %c0_i32, %c0_i32_0, %1, %c0_i32_1 : i32, i32, i32, i32
  }
  func.func @transform_1(%arg0: i32, %arg1: i32) -> (i32, i32, i32, i32) {
    %c0_i32 = arith.constant 0 : i32
    %c0_i32_0 = arith.constant 0 : i32
    %c0_i32_1 = arith.constant 0 : i32
    %c0_i32_2 = arith.constant 0 : i32
    return %arg0, %c0_i32, %c0_i32_0, %c0_i32_1 : i32, i32, i32, i32
  }
}

</mosaic_0001>

<llo_original>
// kernel: tpu_custom_call.1
$region0: #{tpu_custom_call.1}
  #allocation0 [shape = 'u32[]', space=smem, size = 0x4, offset = 0x4, fixed_abs, tag = 'smem constant byte address 0x4 - core index']
  #allocation1 [shape = 'u32[144,128]{1,0:T(1,128)}', space=vmem, size = 0x12000, scoped, tag = 'internal scratch']
  #allocation2 [shape = 'f32[8,128]{1,0:T(8,128)}', space=vmem, size = 0x1000, scoped, tag = 'scratch operand']
  #allocation3 [shape = 'f32[8,128]{1,0:T(8,128)}', space=vmem, size = 0x1000, scoped, tag = 'scratch operand']
  #allocation4 [shape = 'f32[8,128]{1,0:T(8,128)}', space=vmem, size = 0x1000, scoped, tag = 'scratch operand']
  %s0 = inlined_call_operand.hbm [shape: f32[2,4,8,128], index: 0, kind: input, shape index: {}]
  %s1 = inlined_call_operand.hbm [shape: f32[1,3,8,128], index: 1, kind: output, shape index: {}]
  %s2 = sld [smem:[#allocation0]]
  $region26: #{tpu_custom_call.1} parent=0
    _
  %s4 = ssub.s32 1, %s2
  %s5 = scalar_select 0, %s4, %s2
  $region1: #{tpu_custom_call.1} parent=0
    #allocation5 [shape = 'u8[32768]{0}', space=vmem, size = 0x8000, scoped, tag = 'input window, operand 0, single buffered']
    #allocation6 [shape = 's32[1]{0}', space=sflag, size = 0x4, scoped, tag = 'scoped memory for tpu_custom_call.1']
    #allocation7 [shape = 's32[1]{0}', space=sflag, size = 0x4, scoped, tag = 'scoped memory for tpu_custom_call.1']
    #allocation8 [shape = 'u8[12288]{0}', space=vmem, size = 0x3000, scoped, tag = 'output window, operand 0, single buffered']
    %6 = vsyncpa [#allocation6], 0
    %7 = vsyncpa [#allocation7], 0
    // Predicated region
    $region2: #{tpu_custom_call.1} parent=1 // pred_check
      _
    $region3: #{tpu_custom_call.1} parent=1 // pred_check_branch
      %9 = sbr.rel (0) target = $region5
    $region4: #{tpu_custom_call.1} parent=1 // pred_region
      %s10 = sadd.s32 0, 0
      %s12 = ssub.s32 1024, 1024
      %13 = vsyncadd [#allocation6], %s12
      %s14 = smul.addr %s10, 128
      %s15 = scalar_lea.hbm %s0, %s14
      %s16 = sshll.u32 [#allocation5], 4
      %s17 = int_to_ptr.vmem [resolvable:$true] %s16
      %22 = dma.hbm_to_vmem [thread:$0]  %s15, 1024, %s17, [#allocation6], 128, 128, 8
    $region5: #{tpu_custom_call.1} parent=1 // pred_fallthru
      _
    // Predicated region
    $region6: #{tpu_custom_call.1} parent=1 // pred_check
      _
    $region7: #{tpu_custom_call.1} parent=1 // pred_check_branch
      %24 = sbr.rel (0) target = $region9
    $region8: #{tpu_custom_call.1} parent=1 // pred_region
      %25 = dma.done [#allocation6], 1024
    $region9: #{tpu_custom_call.1} parent=1 // pred_fallthru
      _
    %s26 = sadd.s32 0, 0
    %p27 = scmp.eq.s32.totalorder 0, 0
    // Predicated region
    $region10: #{tpu_custom_call.1} parent=1 // pred_check
      %p28 = pneg %p27
    $region11: #{tpu_custom_call.1} parent=1 // pred_check_branch
      %30 = sbr.rel (%p28) target = $region13
    $region12: #{tpu_custom_call.1} parent=1 // pred_region
      %31 = vst [vmem:[#allocation2] sm:$0xff] 0.0
      %32 = vst [vmem:[#allocation3] sm:$0xff] 0.0
      %33 = vst [vmem:[#allocation4] sm:$0xff] 0.0
    $region13: #{tpu_custom_call.1} parent=1 // pred_fallthru
      _
    %v34 = vld [vmem:[#allocation5] sm:$0xff]
    %v35 = vmul.f32 %v34, %v34
    %v36 = vadd.f32 %v35, 0.0
    %v37 = vadd.f32 %v34, 0.0
    %s38 = sadd.s32 0, 32
    %s39 = scalar_lea.vmem [#allocation5], %s38
    %v40 = vld [vmem:[%s39] sm:$0xff]
    %v41 = vmul.f32 %v40, %v40
    %v42 = vadd.f32 %v36, %v41
    %v43 = vadd.f32 %v37, %v40
    %v44 = vadd.f32 %v40, 0.0
    %v45 = vmul.f32 %v43, %v43
    %v46 = vadd.f32 %v45, 0.0
    %s47 = sadd.s32 0, 8
    %s48 = scalar_lea.vmem [#allocation5], %s47
    %v49 = vld [vmem:[%s48] sm:$0xff]
    %v50 = vmul.f32 %v49, %v49
    %v51 = vadd.f32 %v42, %v50
    %v52 = vadd.f32 %v49, 0.0
    %v53 = vadd.f32 %v37, %v49
    %s54 = sadd.s32 %s47, 32
    %s55 = scalar_lea.vmem [#allocation5], %s54
    %v56 = vld [vmem:[%s55] sm:$0xff]
    %v57 = vmul.f32 %v56, %v56
    %v58 = vadd.f32 %v51, %v57
    %v59 = vadd.f32 %v52, %v56
    %v60 = vadd.f32 %v44, %v56
    %v61 = vmul.f32 %v59, %v59
    %v62 = vadd.f32 %v46, %v61
    %s63 = sadd.s32 0, 16
    %s64 = scalar_lea.vmem [#allocation5], %s63
    %v65 = vld [vmem:[%s64] sm:$0xff]
    %v66 = vmul.f32 %v65, %v65
    %v67 = vadd.f32 %v58, %v66
    %v68 = vadd.f32 %v65, 0.0
    %v69 = vadd.f32 %v53, %v65
    %s70 = sadd.s32 %s63, 32
    %s71 = scalar_lea.vmem [#allocation5], %s70
    %v72 = vld [vmem:[%s71] sm:$0xff]
    %v73 = vmul.f32 %v72, %v72
    %v74 = vadd.f32 %v67, %v73
    %v75 = vadd.f32 %v68, %v72
    %v76 = vadd.f32 %v60, %v72
    %v77 = vmul.f32 %v75, %v75
    %v78 = vadd.f32 %v62, %v77
    %s79 = sadd.s32 0, 24
    %s80 = scalar_lea.vmem [#allocation5], %s79
    %v81 = vld [vmem:[%s80] sm:$0xff]
    %v82 = vmul.f32 %v81, %v81
    %v83 = vadd.f32 %v74, %v82
    %v84 = vadd.f32 %v81, 0.0
    %v85 = vadd.f32 %v69, %v81
    %s86 = sadd.s32 %s79, 32
    %s87 = scalar_lea.vmem [#allocation5], %s86
    %v88 = vld [vmem:[%s87] sm:$0xff]
    %v89 = vmul.f32 %v88, %v88
    %v90 = vadd.f32 %v83, %v89
    %v91 = vadd.f32 %v84, %v88
    %v92 = vadd.f32 %v76, %v88
    %v93 = vmul.f32 %v91, %v91
    %v94 = vadd.f32 %v78, %v93
    %v95 = vmul.f32 %v85, %v85
    %v96 = vadd.f32 %v95, 0.0
    %v97 = vmul.f32 %v92, %v92
    %v98 = vadd.f32 %v96, %v97
    %v99 = vld [vmem:[#allocation2] sm:$0xff]
    %v100 = vadd.f32 %v99, %v90
    %101 = vst [vmem:[#allocation2] sm:$0xff] %v100
    %v102 = vld [vmem:[#allocation3] sm:$0xff]
    %v103 = vadd.f32 %v102, %v98
    %104 = vst [vmem:[#allocation3] sm:$0xff] %v103
    %v105 = vld [vmem:[#allocation4] sm:$0xff]
    %v106 = vadd.f32 %v105, %v94
    %107 = vst [vmem:[#allocation4] sm:$0xff] %v106
    // Predicated region
    $region14: #{tpu_custom_call.1} parent=1 // pred_check
      %p108 = pneg %p27
    $region15: #{tpu_custom_call.1} parent=1 // pred_check_branch
      %110 = sbr.rel (%p108) target = $region17
    $region16: #{tpu_custom_call.1} parent=1 // pred_region
      %v111 = vld [vmem:[#allocation2] sm:$0xff]
      %112 = vst [vmem:[#allocation8] sm:$0xff] %v111
      %v113 = vld [vmem:[#allocation3] sm:$0xff]
      %s114 = scalar_lea.vmem [#allocation8], 8
      %115 = vst [vmem:[%s114] sm:$0xff] %v113
      %v116 = vld [vmem:[#allocation4] sm:$0xff]
      %s117 = scalar_lea.vmem [#allocation8], 16
      %118 = vst [vmem:[%s117] sm:$0xff] %v116
    $region17: #{tpu_custom_call.1} parent=1 // pred_fallthru
      _
    // Predicated region
    $region18: #{tpu_custom_call.1} parent=1 // pred_check
      _
    $region19: #{tpu_custom_call.1} parent=1 // pred_check_branch
      %120 = sbr.rel (0) target = $region21
    $region20: #{tpu_custom_call.1} parent=1 // pred_region
      %s122 = ssub.s32 384, 384
      %123 = vsyncadd [#allocation7], %s122
      %s124 = sshll.u32 [#allocation8], 4
      %s125 = int_to_ptr.vmem [resolvable:$true] %s124
      %130 = dma.vmem_to_hbm [thread:$0]  %s125, 384, %s1, [#allocation7], 128, 128, 8
    $region21: #{tpu_custom_call.1} parent=1 // pred_fallthru
      _
    // Predicated region
    $region22: #{tpu_custom_call.1} parent=1 // pred_check
      _
    $region23: #{tpu_custom_call.1} parent=1 // pred_check_branch
      %132 = sbr.rel (0) target = $region25
    $region24: #{tpu_custom_call.1} parent=1 // pred_region
      %133 = dma.done [#allocation7], 384
    $region25: #{tpu_custom_call.1} parent=1 // pred_fallthru
      _
    %134 = vsyncpa [#allocation6], 1
    %135 = vsyncpa [#allocation7], 1

</llo_original>
